<compile_context>
chip_gen: v5e
topology: v5e:2x2
jax: 0.10.0
libtpu: 0.0.40
codegen_flags: <defaults>
</compile_context>

<pallas_src>
import functools

import jax
import jax.numpy as jnp
from jax.experimental import pallas as pl
from jax.experimental.pallas import tpu as pltpu


def _sublane_quantum(itemsize: int) -> int:
    # Sublane packing minimum per dtype width: f32 -> 8, bf16 -> 16, int8/fp8 -> 32.
    return {4: 8, 2: 16, 1: 32}.get(itemsize, 8)


def _tpu_vmem_bytes() -> int:
    try:
        info = pltpu.get_tpu_info()
        cap = getattr(info, "vmem_capacity_bytes", None)
        if cap:
            return int(cap)
    except Exception:
        pass
    return 64 << 20  # conservative fallback (v7x per-TC VMEM)


def _select_tile_rows(rows: int, d: int, itemsize: int, vmem_cap: int) -> int:
    quantum = _sublane_quantum(itemsize)
    if rows <= quantum:
        # Single full block equal to the array extent (satisfies the block
        # constraint by matching the full dim).
        return max(1, rows)

    # Per-row working-set bytes: double-buffered input + output tiles
    # (4 * itemsize per element) plus live intermediates: f32 path keeps more
    # f32 temps (~12 B/elem); narrow dtypes apply the norm natively (~8 B/elem).
    inter = 12 if itemsize >= 4 else 8
    per_row = max(1, d * (4 * itemsize + inter))

    # Budget against the per-TC VMEM (64 MiB on v7x), at ~50% to leave room
    # for Mosaic internal scratch and unfused temps.
    budget = (min(int(vmem_cap), 64 << 20) * 1) // 2
    tile = budget // per_row
    tile = min(tile, 512)  # ~85% of HBM roofline at 512 rows, half the VMEM of 1024

    # Keep >= 8 grid steps when possible (>= 4 per TensorCore on v7x) so the
    # BlockSpec pipeline always has a next block to prefetch.
    target_steps = 8
    rows_per_step = -(-rows // target_steps)
    cap = max(quantum, ((rows_per_step + quantum - 1) // quantum) * quantum)
    tile = min(tile, cap)

    tile = max(quantum, (tile // quantum) * quantum)
    return int(tile)


def _rmsnorm_kernel(*refs, eps, with_scale, with_bias):
    # refs: x_ref, [scale_ref], [bias_ref], o_ref
    x_ref = refs[0]
    idx = 1
    scale_ref = refs[idx] if with_scale else None
    idx += int(with_scale)
    bias_ref = refs[idx] if with_bias else None
    idx += int(with_bias)
    o_ref = refs[idx]

    x = x_ref[...]                                      # native dtype tile (tile_rows, d)
    xf = x.astype(jnp.float32)
    ms = jnp.mean(xf * xf, axis=-1, keepdims=True)      # f32 mean-of-squares (XLU reduce)
    inv_rms = jax.lax.rsqrt(ms + eps)                   # f32 EUP rsqrt
    # Apply the normalization in the input's native dtype (bf16 stays bf16).
    y = x * inv_rms.astype(x.dtype)
    if with_scale:
        y = y * scale_ref[...]                          # (1, d), already x.dtype
    if with_bias:
        y = y + bias_ref[...]
    o_ref[...] = y.astype(o_ref.dtype)


def rmsnorm(x, scale=None, bias=None, *, eps=1e-8, tile_rows=None):
    """RMSNorm over the last axis of x. scale/bias have shape (x.shape[-1],)."""
    orig_shape = x.shape
    d = int(orig_shape[-1])
    rows = 1
    for s in orig_shape[:-1]:
        rows *= int(s)
    x2 = x.reshape(rows, d)

    itemsize = jnp.dtype(x.dtype).itemsize
    quantum = _sublane_quantum(itemsize)
    vmem_cap = _tpu_vmem_bytes()
    if tile_rows is None:
        tile_rows = _select_tile_rows(rows, d, itemsize, vmem_cap)
    else:
        tile_rows = int(tile_rows)
        if rows > quantum:
            tile_rows = max(quantum, (tile_rows // quantum) * quantum)
        tile_rows = min(tile_rows, max(1, rows))

    # No padding: the grid is a ceiling divide and the ragged last block is
    # handled implicitly (padded reads / masked writes).  Safe because the
    # reduction is per-row only.
    num_tiles = int(pl.cdiv(rows, tile_rows))

    with_scale = scale is not None
    with_bias = bias is not None

    params = []
    param_specs = []
    if with_scale:
        params.append(scale.astype(x.dtype).reshape(1, d))   # pre-cast once
        param_specs.append(pl.BlockSpec((1, d), lambda i: (0, 0)))
    if with_bias:
        params.append(bias.astype(x.dtype).reshape(1, d))
        param_specs.append(pl.BlockSpec((1, d), lambda i: (0, 0)))

    kernel = functools.partial(
        _rmsnorm_kernel, eps=eps, with_scale=with_scale, with_bias=with_bias
    )

    # Scoped-VMEM limit: chosen tile's working set + headroom, clamped below
    # the physical per-TC capacity.
    inter = 12 if itemsize >= 4 else 8
    working_set = tile_rows * d * (4 * itemsize + inter) + (2 << 20)
    upper = max(32 << 20, min(int(vmem_cap), 128 << 20) - (8 << 20))
    vmem_limit = int(min(max(32 << 20, working_set + (16 << 20)), upper))

    out = pl.pallas_call(
        kernel,
        out_shape=jax.ShapeDtypeStruct((rows, d), x.dtype),
        grid=(num_tiles,),
        in_specs=[pl.BlockSpec((tile_rows, d), lambda i: (i, 0))] + param_specs,
        out_specs=pl.BlockSpec((tile_rows, d), lambda i: (i, 0)),
        compiler_params=pltpu.CompilerParams(
            dimension_semantics=("parallel",),
            vmem_limit_bytes=vmem_limit,
        ),
    )(x2, *params)

    return out.reshape(orig_shape)


if __name__ == "__main__":
    # Module config mirrored: d = hidden, axis=-1, eps=1e-8, with_scale, with_bias.
    batch, seq, hidden = 2, 8, 32
    eps = 1e-8

    key = jax.random.PRNGKey(0)
    kx, ks, kb = jax.random.split(key, 3)
    x = jax.random.normal(kx, (batch, seq, hidden), dtype=jnp.float32)
    # torch.rand -> uniform [0, 1)
    scale = jax.random.uniform(ks, (hidden,), dtype=jnp.float32)
    bias = jax.random.uniform(kb, (hidden,), dtype=jnp.float32)

    y = rmsnorm(x, scale, bias, eps=eps)
    jax.block_until_ready(y)

    # Reference in plain JAX (mirrors the PyTorch forward exactly).
    ms = jnp.mean(jnp.square(x), axis=-1, keepdims=True)
    y_ref = x / jnp.sqrt(ms + eps) * scale + bias
    assert jnp.allclose(y, y_ref, atol=1e-5, rtol=1e-5), "mismatch vs reference"

    # No-scale/no-bias path (module defaults) + ragged row count (15 rows with
    # an 8-row tile) to exercise the implicit masked last block with no pad.
    x_odd = jax.random.normal(kx, (3, 5, hidden), dtype=jnp.float32)
    y2 = rmsnorm(x_odd, eps=eps)
    jax.block_until_ready(y2)
    ms2 = jnp.mean(jnp.square(x_odd), axis=-1, keepdims=True)
    y2_ref = x_odd / jnp.sqrt(ms2 + eps)
    assert jnp.allclose(y2, y2_ref, atol=1e-5, rtol=1e-5), "mismatch (no scale/bias, ragged)"

    # bf16 path: norm applied natively in bf16, stats in f32 (looser tolerance).
    xb = jax.random.normal(kx, (4, 7, hidden), dtype=jnp.bfloat16)
    yb = rmsnorm(xb, scale, bias, eps=eps)
    jax.block_until_ready(yb)
    xbf = xb.astype(jnp.float32)
    msb = jnp.mean(jnp.square(xbf), axis=-1, keepdims=True)
    yb_ref = xbf / jnp.sqrt(msb + eps) * scale + bias
    assert jnp.allclose(yb.astype(jnp.float32), yb_ref, atol=3e-2, rtol=3e-2), "mismatch (bf16)"

    print("KERNEL_OK")
</pallas_src>

<mosaic_0001>
module attributes {stable_mosaic.version = 11 : i64} {
  func.func @_rmsnorm_kernel(%arg0: i32, %arg1: memref<8x32xf32, #tpu.memory_space<vmem>>, %arg2: memref<1x32xf32, #tpu.memory_space<vmem>>, %arg3: memref<1x32xf32, #tpu.memory_space<vmem>>, %arg4: memref<8x32xf32, #tpu.memory_space<vmem>>) attributes {dimension_semantics = [#tpu.dimension_semantics<parallel>], iteration_bounds = array<i64: 2>, scalar_prefetch = 0 : i64, scratch_operands = 0 : i64, tpu.core_type = #tpu.core_type<tc>, window_params = [{transform_indices = @transform_0, window_bounds = array<i64: 8, 32>}, {pipeline_mode = #tpu.pipeline_mode<synchronous>, transform_indices = @transform_1, window_bounds = array<i64: 1, 32>}, {pipeline_mode = #tpu.pipeline_mode<synchronous>, transform_indices = @transform_2, window_bounds = array<i64: 1, 32>}, {transform_indices = @transform_3, window_bounds = array<i64: 8, 32>}]} {
    %c0 = arith.constant 0 : index
    %c0_0 = arith.constant 0 : index
    %0 = vector.load %arg1[%c0, %c0_0] : memref<8x32xf32, #tpu.memory_space<vmem>>, vector<8x32xf32>
    %1 = arith.mulf %0, %0 : vector<8x32xf32>
    %cst = arith.constant dense<0.000000e+00> : vector<8xf32>
    %2 = vector.multi_reduction <add>, %1, %cst [1] : vector<8x32xf32> to vector<8xf32>
    %3 = vector.shape_cast %2 : vector<8xf32> to vector<8x1xf32>
    %cst_1 = arith.constant 3.200000e+01 : f32
    %4 = vector.broadcast %cst_1 : f32 to vector<8x1xf32>
    %5 = arith.divf %3, %4 : vector<8x1xf32>
    %cst_2 = arith.constant 9.99999993E-9 : f32
    %6 = vector.broadcast %cst_2 : f32 to vector<8x1xf32>
    %7 = arith.addf %5, %6 : vector<8x1xf32>
    %8 = math.rsqrt %7 : vector<8x1xf32>
    %9 = vector.broadcast %8 : vector<8x1xf32> to vector<8x32xf32>
    %10 = arith.mulf %0, %9 : vector<8x32xf32>
    %c0_3 = arith.constant 0 : index
    %c0_4 = arith.constant 0 : index
    %11 = vector.load %arg2[%c0_3, %c0_4] : memref<1x32xf32, #tpu.memory_space<vmem>>, vector<1x32xf32>
    %12 = vector.broadcast %11 : vector<1x32xf32> to vector<8x32xf32>
    %13 = arith.mulf %10, %12 : vector<8x32xf32>
    %c0_5 = arith.constant 0 : index
    %c0_6 = arith.constant 0 : index
    %14 = vector.load %arg3[%c0_5, %c0_6] : memref<1x32xf32, #tpu.memory_space<vmem>>, vector<1x32xf32>
    %15 = vector.broadcast %14 : vector<1x32xf32> to vector<8x32xf32>
    %16 = arith.addf %13, %15 : vector<8x32xf32>
    %c0_7 = arith.constant 0 : index
    %c0_8 = arith.constant 0 : index
    %17 = vector.load %arg4[%c0_7, %c0_8] : memref<8x32xf32, #tpu.memory_space<vmem>>, vector<8x32xf32>
    tpu.vector_store %arg4[%c0_7, %c0_8], %16 {strides = array<i32>} : memref<8x32xf32, #tpu.memory_space<vmem>>, vector<8x32xf32>,
    return
  }
  func.func @transform_0(%arg0: i32) -> (i32, i32) {
    %c0_i32 = arith.constant 0 : i32
    %c0_i32_0 = arith.constant 0 : i32
    return %arg0, %c0_i32 : i32, i32
  }
  func.func @transform_1(%arg0: i32) -> (i32, i32) {
    %c0_i32 = arith.constant 0 : i32
    %c0_i32_0 = arith.constant 0 : i32
    %c0_i32_1 = arith.constant 0 : i32
    return %c0_i32, %c0_i32_0 : i32, i32
  }
  func.func @transform_2(%arg0: i32) -> (i32, i32) {
    %c0_i32 = arith.constant 0 : i32
    %c0_i32_0 = arith.constant 0 : i32
    %c0_i32_1 = arith.constant 0 : i32
    return %c0_i32, %c0_i32_0 : i32, i32
  }
  func.func @transform_3(%arg0: i32) -> (i32, i32) {
    %c0_i32 = arith.constant 0 : i32
    %c0_i32_0 = arith.constant 0 : i32
    return %arg0, %c0_i32 : i32, i32
  }
}

</mosaic_0001>

<llo_original>
// kernel: tpu_custom_call.1
$region0: #{tpu_custom_call.1}
  #allocation0 [shape = 'u32[]', space=smem, size = 0x4, offset = 0x4, fixed_abs, tag = 'smem constant byte address 0x4 - core index']
  #allocation1 [shape = 'u32[72,128]{1,0:T(1,128)}', space=vmem, size = 0x9000, scoped, tag = 'internal scratch']
  %s0 = inlined_call_operand.hbm [shape: f32[16,32], index: 0, kind: input, shape index: {}]
  %s1 = inlined_call_operand.hbm [shape: f32[1,32], index: 1, kind: input, shape index: {}]
  %s2 = inlined_call_operand.vmem [shape: f32[1,32], index: 2, kind: input, shape index: {}]
  %s3 = inlined_call_operand.hbm [shape: f32[16,32], index: 3, kind: output, shape index: {}]
  %s4 = sld [smem:[#allocation0]]
  $region53: #{tpu_custom_call.1} parent=0
    _
  %s6 = ssub.s32 1, %s4
  %s7 = scalar_select 0, %s6, %s4
  $region1: #{tpu_custom_call.1} parent=0
    #allocation2 [shape = 'u8[8192]{0}', space=vmem, size = 0x2000, scoped, tag = 'input window, operand 0']
    #allocation3 [shape = 's32[2]{0}', space=sflag, size = 0x8, scoped, tag = 'scoped memory for tpu_custom_call.1']
    #allocation4 [shape = 's32[2]{0}', space=sflag, size = 0x8, scoped, tag = 'scoped memory for tpu_custom_call.1']
    #allocation5 [shape = 'u8[512]{0}', space=vmem, size = 0x400, scoped, tag = 'input window, operand 1, single buffered']
    #allocation6 [shape = 's32[1]{0}', space=sflag, size = 0x4, scoped, tag = 'scoped memory for tpu_custom_call.1']
    #allocation7 [shape = 'u8[8192]{0}', space=vmem, size = 0x2000, scoped, tag = 'output window, operand 0']
    %8 = vsyncpa [#allocation3], 0
    %s9 = scalar_lea.sflag [#allocation3], 1
    %10 = vsyncpa %s9, 0
    %11 = vsyncpa [#allocation6], 0
    %12 = vsyncpa [#allocation4], 0
    %s13 = scalar_lea.sflag [#allocation4], 1
    %14 = vsyncpa %s13, 0
    loop: start=0, step=1, limit=4
    $region2: #{tpu_custom_call.1} parent=1 // loop_pre_header
      _
    $region3: #{tpu_custom_call.1} parent=1 // loop_header
      %s16 = sphi 0, %s20
      %p17 = scmp.ge.s32.totalorder %s16, 4
      %s26 = sphi 0, %s28
      %s29 = sphi 0, %s26
      %s30 = sphi 0, %s29
      %s46 = sphi 0, %s30
      %s50 = sphi 0, %s50
      %s52 = sphi 0, %s50
      %s53 = sphi 0, %s52
      %s67 = sphi 0, %s53
      %s71 = sphi 0, %s71
      %s73 = sphi 0, %s71
      %s74 = sphi 0, %s73
      %s88 = sphi 0, %s74
      %s94 = sphi 0, %s96
      %s97 = sphi 0, %s94
      %s98 = sphi 0, %s97
      %s114 = sphi 0, %s98
    $region4: #{tpu_custom_call.1} parent=1 // loop_header_branch
      %19 = sbr.rel (%p17) target = $region8
    $region5: #{tpu_custom_call.1} parent=1 // loop_body
      %s21 = ssub.s32 %s16, 1
      %s22 = ssub.s32 %s16, 2
      %s23 = sadd.s32 %s16, 1
      %s24 = ssub.s32 %s16, %s23
      %p25 = scmp.eq.s32.totalorder %s24, 0
      %s27 = sadd.s32 %s26, 1
      %s28 = scalar_select %p25, %s26, %s27
      %p31 = pneg %p25
      %p32 = scmp.eq.s32.totalorder %s16, 1
      %p33 = por %p31, %p32
      %p34 = scmp.ne.s32.totalorder %s26, %s29
      %p35 = scmp.eq.s32.totalorder %s16, 0
      %p36 = por %p34, %p35
      %p37 = scmp.ne.s32.totalorder %s26, %s29
      %p38 = scmp.eq.s32.totalorder %s21, 1
      %p39 = por %p37, %p38
      %p40 = scmp.ne.s32.totalorder %s29, %s30
      %p41 = scmp.eq.s32.totalorder %s21, 0
      %p42 = por %p40, %p41
      %p43 = scmp.ne.s32.totalorder %s29, %s30
      %p44 = scmp.eq.s32.totalorder %s22, 1
      %p45 = por %p43, %p44
      %p47 = scmp.ne.s32.totalorder %s30, %s46
      %p48 = scmp.eq.s32.totalorder %s22, 0
      %p49 = por %p47, %p48
      %s51 = sadd.s32 %s50, 1
      %p54 = scmp.eq.s32.totalorder %s16, 1
      %p55 = scmp.ne.s32.totalorder %s50, %s52
      %p56 = scmp.eq.s32.totalorder %s16, 0
      %p57 = por %p55, %p56
      %p58 = scmp.ne.s32.totalorder %s50, %s52
      %p59 = scmp.eq.s32.totalorder %s21, 1
      %p60 = por %p58, %p59
      %p61 = scmp.ne.s32.totalorder %s52, %s53
      %p62 = scmp.eq.s32.totalorder %s21, 0
      %p63 = por %p61, %p62
      %p64 = scmp.ne.s32.totalorder %s52, %s53
      %p65 = scmp.eq.s32.totalorder %s22, 1
      %p66 = por %p64, %p65
      %p68 = scmp.ne.s32.totalorder %s53, %s67
      %p69 = scmp.eq.s32.totalorder %s22, 0
      %p70 = por %p68, %p69
      %s72 = sadd.s32 %s71, 1
      %p75 = scmp.eq.s32.totalorder %s16, 1
      %p76 = scmp.ne.s32.totalorder %s71, %s73
      %p77 = scmp.eq.s32.totalorder %s16, 0
      %p78 = por %p76, %p77
      %p79 = scmp.ne.s32.totalorder %s71, %s73
      %p80 = scmp.eq.s32.totalorder %s21, 1
      %p81 = por %p79, %p80
      %p82 = scmp.ne.s32.totalorder %s73, %s74
      %p83 = scmp.eq.s32.totalorder %s21, 0
      %p84 = por %p82, %p83
      %p85 = scmp.ne.s32.totalorder %s73, %s74
      %p86 = scmp.eq.s32.totalorder %s22, 1
      %p87 = por %p85, %p86
      %p89 = scmp.ne.s32.totalorder %s74, %s88
      %p90 = scmp.eq.s32.totalorder %s22, 0
      %p91 = por %p89, %p90
      %s92 = ssub.s32 %s16, %s23
      %p93 = scmp.eq.s32.totalorder %s92, 0
      %s95 = sadd.s32 %s94, 1
      %s96 = scalar_select %p93, %s94, %s95
      %p99 = pneg %p93
      %p100 = scmp.eq.s32.totalorder %s16, 1
      %p101 = por %p99, %p100
      %p102 = scmp.ne.s32.totalorder %s94, %s97
      %p103 = scmp.eq.s32.totalorder %s16, 0
      %p104 = por %p102, %p103
      %p105 = scmp.ne.s32.totalorder %s94, %s97
      %p106 = scmp.eq.s32.totalorder %s21, 1
      %p107 = por %p105, %p106
      %p108 = scmp.ne.s32.totalorder %s97, %s98
      %p109 = scmp.eq.s32.totalorder %s21, 0
      %p110 = por %p108, %p109
      %p111 = scmp.ne.s32.totalorder %s97, %s98
      %p112 = scmp.eq.s32.totalorder %s22, 1
      %p113 = por %p111, %p112
      %p115 = scmp.ne.s32.totalorder %s98, %s114
      %p116 = scmp.eq.s32.totalorder %s22, 0
      %p117 = por %p115, %p116
      %p118 = scmp.le.s32.totalorder 1, %s16
      %p119 = scmp.lt.s32.totalorder %s16, 3
      %p120 = pnand %p118, %p119
      %p121 = pneg %p120
      // Predicated region
      $region9: #{tpu_custom_call.1} parent=5 // pred_check
        _
      $region10: #{tpu_custom_call.1} parent=5 // pred_check_branch
        %123 = sbr.rel (%p120) target = $region12
      $region11: #{tpu_custom_call.1} parent=5 // pred_region
        %s124 = ssub.s32 %s16, 1
        // Predicated region
        $region13: #{tpu_custom_call.1} parent=11 // pred_check
          %p125 = pneg %p63
        $region14: #{tpu_custom_call.1} parent=11 // pred_check_branch
          %127 = sbr.rel (%p125) target = $region16
        $region15: #{tpu_custom_call.1} parent=11 // pred_region
          %129 = vsyncadd [#allocation6], 0
          %s131 = sshll.u32 %s1, 4
          %s132 = int_to_ptr.hbm [resolvable:$true] %s131
          %s133 = sshll.u32 [#allocation5], 4
          %s134 = int_to_ptr.vmem [resolvable:$true] %s133
          %136 = dma.hbm_to_vmem [thread:$0]  %s132, 16, %s134, [#allocation6]
        $region16: #{tpu_custom_call.1} parent=11 // pred_fallthru
          _
        // Predicated region
        $region17: #{tpu_custom_call.1} parent=11 // pred_check
          %p137 = pneg %p84
        $region18: #{tpu_custom_call.1} parent=11 // pred_check_branch
          %139 = sbr.rel (%p137) target = $region20
        $region19: #{tpu_custom_call.1} parent=11 // pred_region
          _
        $region20: #{tpu_custom_call.1} parent=11 // pred_fallthru
          _
      $region12: #{tpu_custom_call.1} parent=5 // pred_fallthru
        _
      %p140 = scmp.lt.s32.totalorder %s16, 2
      // Predicated region
      $region21: #{tpu_custom_call.1} parent=5 // pred_check
        %p141 = pneg %p140
      $region22: #{tpu_custom_call.1} parent=5 // pred_check_branch
        %143 = sbr.rel (%p141) target = $region24
      $region23: #{tpu_custom_call.1} parent=5 // pred_region
        // Predicated region
        $region25: #{tpu_custom_call.1} parent=23 // pred_check
          %p144 = pneg %p36
        $region26: #{tpu_custom_call.1} parent=23 // pred_check_branch
          %146 = sbr.rel (%p144) target = $region28
        $region27: #{tpu_custom_call.1} parent=23 // pred_region
          %s147 = sand.u32 %s26, 1
          %s148 = scalar_lea.sflag [#allocation3], %s147
          %s149 = sand.u32 %s26, 1
          %s150 = smul.addr %s149, 8
          %s151 = scalar_lea.vmem [#allocation2], %s150
          %153 = vsyncadd %s148, 0
          %s154 = smul.addr %s16, 8
          %s155 = scalar_lea.hbm %s0, %s154
          %s157 = sshll.u32 %s155, 4
          %s158 = int_to_ptr.hbm [resolvable:$true] %s157
          %s159 = sshll.u32 %s151, 4
          %s160 = int_to_ptr.vmem [resolvable:$true] %s159
          %162 = dma.hbm_to_vmem [thread:$0]  %s158, 128, %s160, %s148
        $region28: #{tpu_custom_call.1} parent=23 // pred_fallthru
          _
      $region24: #{tpu_custom_call.1} parent=5 // pred_fallthru
        _
      %p163 = scmp.le.s32.totalorder 1, %s16
      %p164 = scmp.lt.s32.totalorder %s16, 3
      %p165 = pnand %p163, %p164
      %p166 = pneg %p165
      // Predicated region
      $region29: #{tpu_custom_call.1} parent=5 // pred_check
        _
      $region30: #{tpu_custom_call.1} parent=5 // pred_check_branch
        %168 = sbr.rel (%p165) target = $region32
      $region31: #{tpu_custom_call.1} parent=5 // pred_region
        %s169 = ssub.s32 %s16, 1
        %s170 = sand.u32 %s29, 1
        %s171 = scalar_lea.sflag [#allocation3], %s170
        %s172 = sand.u32 %s29, 1
        %s173 = smul.addr %s172, 8
        %s174 = scalar_lea.vmem [#allocation2], %s173
        // Predicated region
        $region33: #{tpu_custom_call.1} parent=31 // pred_check
          %p175 = pneg %p42
        $region34: #{tpu_custom_call.1} parent=31 // pred_check_branch
          %177 = sbr.rel (%p175) target = $region36
        $region35: #{tpu_custom_call.1} parent=31 // pred_region
          %179 = dma.done %s171, 128
        $region36: #{tpu_custom_call.1} parent=31 // pred_fallthru
          _
        // Predicated region
        $region37: #{tpu_custom_call.1} parent=31 // pred_check
          %p180 = pneg %p63
        $region38: #{tpu_custom_call.1} parent=31 // pred_check_branch
          %182 = sbr.rel (%p180) target = $region40
        $region39: #{tpu_custom_call.1} parent=31 // pred_region
          %184 = dma.done [#allocation6], 16
        $region40: #{tpu_custom_call.1} parent=31 // pred_fallthru
          _
        %s185 = sand.u32 %s29, 1
        %s186 = scalar_lea.sflag [#allocation3], %s185
        %s187 = sand.u32 %s29, 1
        %s188 = smul.addr %s187, 8
        %s189 = scalar_lea.vmem [#allocation2], %s188
        %p190 = pneg %p42
        %p191 = pneg %p39
        %p192 = pneg %p63
        %p193 = pneg %p60
        %p194 = pneg %p84
        %p195 = pneg %p81
        %p196 = pneg %p110
        %p197 = pneg %p107
        %s198 = sand.u32 %s97, 1
        %s199 = scalar_lea.sflag [#allocation4], %s198
        %s200 = sand.u32 %s97, 1
        %s201 = smul.addr %s200, 8
        %s202 = scalar_lea.vmem [#allocation7], %s201
        %v203 = vld [vmem:[%s174] sm:$0xff]
        %v204 = vmul.f32 %v203, %v203
        %vm205 = vcmask 261120
        %v206 = vsel %vm205, %v204, 0.0
        %207 = vadd.xlane.f32.xlu0 %v206
        %v208 = vpop.xlane.xlu0 %207
        %v209 = vrcp.pop 32.0
        %v210 = vmul.f32 32.0, %v209
        %v211 = vsub.f32 1.0, %v210
        %v212 = vmul.f32 %v209, %v211
        %v213 = vadd.f32 %v209, %v212
        %vm214 = vweird.f32 %v209
        %v215 = vsel %vm214, %v209, %v213
        %v216 = vmul.f32 %v208, %v215
        %v217 = vadd.f32 %v216, 1e-08
        %v218 = vrsqrt.pop %v217
        %v219 = vmul.f32 %v218, %v217
        %v220 = vmul.f32 %v219, %v218
        %v221 = vmul.f32 0.5, %v220
        %v222 = vsub.f32 1.5, %v221
        %v223 = vmul.f32 %v218, %v222
        %vm224 = vweird.f32 %v217
        %vm225 = vweird.f32 %v218
        %vm226 = vmor %vm224, %vm225
        %v227 = vsel %vm226, %v218, %v223
        %v228 = vmul.f32 %v203, %v227
        %v229 = vld [vmem:[#allocation5] sm:$0x1]
        %v231 = vperm.slane %v229, 0
        %v233 = vmul.f32 %v228, %v231
        %v234 = vld [vmem:[%s2] sm:$0x1]
        %v236 = vperm.slane %v234, 0
        %v238 = vadd.f32 %v233, %v236
        %239 = vst.msk [vmem:[%s202] sm:$0xff] %vm205, %v238
        %s240 = sand.u32 %s97, 1
        %s241 = scalar_lea.sflag [#allocation4], %s240
        %s242 = sand.u32 %s97, 1
        %s243 = smul.addr %s242, 8
        %s244 = scalar_lea.vmem [#allocation7], %s243
        // Predicated region
        $region41: #{tpu_custom_call.1} parent=31 // pred_check
          %p245 = pneg %p107
        $region42: #{tpu_custom_call.1} parent=31 // pred_check_branch
          %247 = sbr.rel (%p245) target = $region44
        $region43: #{tpu_custom_call.1} parent=31 // pred_region
          %249 = vsyncadd %s241, 0
          %s250 = smul.addr %s21, 8
          %s251 = scalar_lea.hbm %s3, %s250
          %s253 = sshll.u32 %s244, 4
          %s254 = int_to_ptr.vmem [resolvable:$true] %s253
          %s255 = sshll.u32 %s251, 4
          %s256 = int_to_ptr.hbm [resolvable:$true] %s255
          %258 = dma.vmem_to_hbm [thread:$0]  %s254, 128, %s256, %s241
        $region44: #{tpu_custom_call.1} parent=31 // pred_fallthru
          _
      $region32: #{tpu_custom_call.1} parent=5 // pred_fallthru
        _
      %p259 = scmp.le.s32.totalorder 2, %s16
      // Predicated region
      $region45: #{tpu_custom_call.1} parent=5 // pred_check
        %p260 = pneg %p259
      $region46: #{tpu_custom_call.1} parent=5 // pred_check_branch
        %262 = sbr.rel (%p260) target = $region48
      $region47: #{tpu_custom_call.1} parent=5 // pred_region
        %s263 = ssub.s32 %s16, 2
        // Predicated region
        $region49: #{tpu_custom_call.1} parent=47 // pred_check
          %p264 = pneg %p113
        $region50: #{tpu_custom_call.1} parent=47 // pred_check_branch
          %266 = sbr.rel (%p264) target = $region52
        $region51: #{tpu_custom_call.1} parent=47 // pred_region
          %s267 = sand.u32 %s98, 1
          %s268 = scalar_lea.sflag [#allocation4], %s267
          %s269 = sand.u32 %s98, 1
          %s270 = smul.addr %s269, 8
          %s271 = scalar_lea.vmem [#allocation7], %s270
          %273 = dma.done %s268, 128
        $region52: #{tpu_custom_call.1} parent=47 // pred_fallthru
          _
      $region48: #{tpu_custom_call.1} parent=5 // pred_fallthru
        _
    $region6: #{tpu_custom_call.1} parent=1 // loop_footer
      %s20 = sadd.s32 1, %s16
    $region7: #{tpu_custom_call.1} parent=1 // loop_footer_branch
      %15 = sbr.rel target = $region3
    $region8: #{tpu_custom_call.1} parent=1 // loop_exit
      _
    %274 = vsyncpa [#allocation3], 1
    %s275 = scalar_lea.sflag [#allocation3], 1
    %276 = vsyncpa %s275, 1
    %277 = vsyncpa [#allocation6], 1
    %278 = vsyncpa [#allocation4], 1
    %s279 = scalar_lea.sflag [#allocation4], 1
    %280 = vsyncpa %s279, 1

</llo_original>
